<compile_context>
chip_gen: v7x
topology: tpu7x:2x2x1
jax: 0.10.0
libtpu: 0.0.40
codegen_flags: <defaults>
</compile_context>

<pallas_src>
import jax
import jax.numpy as jnp
from jax.experimental import pallas as pl
from jax.experimental.pallas import tpu as pltpu


# Lane-dense slab width (multiple of 128 lanes -> fewer, larger DMAs).
_LANES = 512
# ~2 MiB per block => 2 in-bufs + 2 out-bufs = 8 MiB, fits the 16 MiB default
# scoped VMEM on v5e and leaves ample headroom on v6e/v7x (64 MiB physical).
_TARGET_BLOCK_BYTES = 2 * 1024 * 1024
# Multiple of 32 sublanes: legal packing granularity for 4-, 2- and 1-byte dtypes.
_SUBLANE_MULT = 32


def _identity_kernel(x_ref, o_ref):
    # Whole-tile load + store (VMEM -> vreg -> VMEM); the surrounding
    # pallas_call pipeline handles the HBM <-> VMEM DMAs.
    o_ref[...] = x_ref[...]


@jax.jit
def base_model_forward(x: jnp.ndarray) -> jnp.ndarray:
    """Pallas-backed stand-in for BaseModel.forward (identity pass-through)."""
    orig_shape = x.shape
    dtype = x.dtype
    n = x.size
    if n == 0:
        return x

    # Flatten to a lane-dense 2-D slab [rows, _LANES]; pad the tail if needed.
    flat = x.reshape(-1)
    pad = (-n) % _LANES
    if pad:
        flat = jnp.pad(flat, (0, pad))
    rows = flat.size // _LANES
    x2d = flat.reshape(rows, _LANES)

    # Generation-safe tile: ~2 MiB per block, rounded to a 32-sublane multiple.
    itemsize = jnp.dtype(dtype).itemsize
    tile_r = (_TARGET_BLOCK_BYTES // (_LANES * itemsize)) // _SUBLANE_MULT * _SUBLANE_MULT
    tile_r = max(tile_r, _SUBLANE_MULT)
    if rows <= tile_r:
        # Small inputs: full-extent row block (always legal, no wasted VMEM).
        tile_r = rows

    grid = (pl.cdiv(rows, tile_r),)

    out2d = pl.pallas_call(
        _identity_kernel,
        out_shape=jax.ShapeDtypeStruct((rows, _LANES), dtype),
        grid=grid,
        in_specs=[pl.BlockSpec((tile_r, _LANES), lambda i: (i, 0))],
        out_specs=pl.BlockSpec((tile_r, _LANES), lambda i: (i, 0)),
        # Pure copy: alias input slab to output, no extra HBM allocation.
        input_output_aliases={0: 0},
        compiler_params=pltpu.CompilerParams(
            dimension_semantics=("parallel",),
        ),
    )(x2d)

    out_flat = out2d.reshape(-1)
    if pad:
        out_flat = out_flat[:n]
    return out_flat.reshape(orig_shape)


def base_model_predict(x: jnp.ndarray) -> jnp.ndarray:
    """Mirrors BaseModel.predict: eval-mode, no-grad forward.  In JAX this is
    just the forward (no grad is taken unless requested)."""
    return base_model_forward(x)


def base_model_get_loss(pred, target):
    # TODO(synk): abstract in the reference module (NotImplementedError).
    raise NotImplementedError


def base_model_get_metrics(pred, target):
    # TODO(synk): abstract in the reference module (NotImplementedError).
    raise NotImplementedError


if __name__ == "__main__":
    key = jax.random.PRNGKey(0)
    # Small NCHW input consistent with a vision-style BaseModel subclass.
    x = jax.random.normal(key, (2, 4, 16, 16), dtype=jnp.float32)

    y = base_model_predict(x)
    jax.block_until_ready(y)

    # Sanity: identity pass-through must match input exactly.
    assert y.shape == x.shape and y.dtype == x.dtype
    assert bool(jnp.all(y == x))

    print("KERNEL_OK")
</pallas_src>

<mosaic_0001>
module attributes {stable_mosaic.version = 11 : i64} {
  func.func @_identity_kernel(%arg0: i32, %arg1: memref<4x512xf32, #tpu.memory_space<vmem>>, %arg2: memref<4x512xf32, #tpu.memory_space<vmem>>) attributes {dimension_semantics = [#tpu.dimension_semantics<parallel>], iteration_bounds = array<i64: 1>, scalar_prefetch = 0 : i64, scratch_operands = 0 : i64, tpu.core_type = #tpu.core_type<tc>, window_params = [{transform_indices = @transform_0, window_bounds = array<i64: 4, 512>}, {transform_indices = @transform_1, window_bounds = array<i64: 4, 512>}]} {
    %c0 = arith.constant 0 : index
    %c0_0 = arith.constant 0 : index
    %0 = vector.load %arg1[%c0, %c0_0] : memref<4x512xf32, #tpu.memory_space<vmem>>, vector<4x512xf32>
    %c0_1 = arith.constant 0 : index
    %c0_2 = arith.constant 0 : index
    %1 = vector.load %arg2[%c0_1, %c0_2] : memref<4x512xf32, #tpu.memory_space<vmem>>, vector<4x512xf32>
    tpu.vector_store %arg2[%c0_1, %c0_2], %0 {strides = array<i32>} : memref<4x512xf32, #tpu.memory_space<vmem>>, vector<4x512xf32>,
    return
  }
  func.func @transform_0(%arg0: i32) -> (i32, i32) {
    %c0_i32 = arith.constant 0 : i32
    %c0_i32_0 = arith.constant 0 : i32
    return %arg0, %c0_i32 : i32, i32
  }
  func.func @transform_1(%arg0: i32) -> (i32, i32) {
    %c0_i32 = arith.constant 0 : i32
    %c0_i32_0 = arith.constant 0 : i32
    return %arg0, %c0_i32 : i32, i32
  }
}

</mosaic_0001>

<llo_original>
// kernel: base_model_forward.1
$region0: #{base_model_forward.1}
  #allocation0 [shape = 'u32[]', space=smem, size = 0x4, offset = 0x4, fixed_abs, tag = 'smem constant byte address 0x4 - core index']
  #allocation1 [shape = 'u32[144,128]{1,0:T(1,128)}', space=vmem, size = 0x12000, scoped, tag = 'internal scratch']
  %s0 = inlined_call_operand.vmem [shape: f32[4,512], index: 0, kind: input, shape index: {}, may-alias: {0,1}]
  %s1 = inlined_call_operand.vmem [shape: f32[4,512], index: 1, kind: output, shape index: {}, may-alias: {0,1}]
  %s2 = sld [smem:[#allocation0]]
  $region14: #{base_model_forward.1} parent=0
    _
  %s4 = ssub.s32 1, %s2
  %s5 = scalar_select 0, %s4, %s2
  // Predicated region
  $region2: #{base_model_forward.1} parent=0 // pred_check
    _
  $region3: #{base_model_forward.1} parent=0 // pred_check_branch
    %7 = sbr.rel (0) target = $region5
  $region4: #{base_model_forward.1} parent=0 // pred_region
    _
  $region5: #{base_model_forward.1} parent=0 // pred_fallthru
    _
  %v8 = vld [vmem:[%s0] sm:$0xff]
  %v9 = vld [vmem:[%s0 + $0x8] sm:$0xff]
  %10 = vst [vmem:[%s1] sm:$0xff] %v8
  %11 = vst [vmem:[%s1 + $0x8] sm:$0xff] %v9
  // Predicated region
  $region6: #{base_model_forward.1} parent=0 // pred_check
    _
  $region7: #{base_model_forward.1} parent=0 // pred_check_branch
    %13 = sbr.rel (0) target = $region9
  $region8: #{base_model_forward.1} parent=0 // pred_region
    _
  $region9: #{base_model_forward.1} parent=0 // pred_fallthru
    _
  // Predicated region
  $region10: #{base_model_forward.1} parent=0 // pred_check
    _
  $region11: #{base_model_forward.1} parent=0 // pred_check_branch
    %15 = sbr.rel (0) target = $region13
  $region12: #{base_model_forward.1} parent=0 // pred_region
    _
  $region13: #{base_model_forward.1} parent=0 // pred_fallthru
    _

</llo_original>
